<compile_context>
chip_gen: v5e
topology: v5e:2x2
jax: 0.10.0
libtpu: 0.0.40
codegen_flags: <defaults>
</compile_context>

<pallas_src>
import jax
import jax.numpy as jnp
from jax.experimental import pallas as pl
from jax.experimental.pallas import tpu as pltpu


def _round_up(x, m):
    return ((x + m - 1) // m) * m


def _default_tile_m(M):
    """Bounded batch tile: multiple of 8, <= 512, and (when M is big enough)
    small enough that the batch axis has >= 2 grid steps (megacore on v7x)."""
    if M <= 8:
        return M  # tiny batch: one tile equal to the full dim is legal
    m8 = _round_up(M, 8)
    tile = min(512, m8)
    if m8 // tile < 2:
        tile = max(8, _round_up(m8 // 2, 8))
    return tile


def _default_tile_n(N):
    """Hidden tile: a multiple of 128 dividing N (lane-dense stores), else full N."""
    if N % 128 != 0:
        return N  # must equal the full dim to satisfy the (8,128) rule
    for cand in (512, 384, 256, 128):
        if N % cand == 0:
            return cand
    return N


def _img_emb_kernel(x_ref, w_ref, b_ref, o_ref):
    # x_ref : (TM, K)   input tile
    # w_ref : (K, TN)   weight tile (in, out)
    # b_ref : (1, TN)   bias row (f32)
    # o_ref : (TM, TN)  output tile
    acc = jnp.dot(x_ref[...], w_ref[...], preferred_element_type=jnp.float32)
    acc = acc + b_ref[...]                      # f32 epilogue, broadcast over rows
    o_ref[...] = jnp.maximum(acc, 0.0).astype(o_ref.dtype)


def img_emb_forward(x, weight_t, bias, *, tile_m=None, tile_n=None, mxu_dtype=None):
    """relu(x @ weight_t + bias) via a Pallas TPU kernel.

    x        : (M, K) float32
    weight_t : (K, N) float32   (transpose of PyTorch nn.Linear.weight)
    bias     : (N,)   float32
    mxu_dtype: optional (e.g. jnp.bfloat16) — cast MXU operands only; the
               accumulate / bias / ReLU stay in float32.
    """
    M, K = x.shape
    K2, N = weight_t.shape
    assert K == K2
    assert bias.shape == (N,)
    out_dtype = x.dtype

    if tile_m is None:
        tile_m = _default_tile_m(M)
    if tile_n is None:
        tile_n = _default_tile_n(N)
    assert tile_m == M or tile_m % 8 == 0, "tile_m must be a multiple of 8 (or == M)"
    assert N % tile_n == 0 and (tile_n == N or tile_n % 128 == 0), \
        "tile_n must divide N and be a multiple of 128 (or == N)"

    # Pad the batch so the grid covers it exactly (output is sliced back).
    m_pad = _round_up(M, tile_m)
    if m_pad != M:
        x = jnp.pad(x, ((0, m_pad - M), (0, 0)))

    # Optional bf16 MXU operands: halves x/weight HBM+VMEM traffic.
    if mxu_dtype is not None:
        x = x.astype(mxu_dtype)
        weight_t = weight_t.astype(mxu_dtype)

    # Bias presented once as a (1, N) f32 row (cheap; outside the hot kernel).
    bias2d = bias.astype(jnp.float32).reshape(1, N)

    grid = (m_pad // tile_m, N // tile_n)

    # Explicit VMEM budget: 2x double-buffered x, weight and out tiles + bias.
    in_item = jnp.dtype(x.dtype).itemsize
    out_item = jnp.dtype(out_dtype).itemsize
    vmem_need = (2 * tile_m * K * in_item          # x tile, double buffered
                 + 2 * K * tile_n * in_item        # weight tile, double buffered
                 + 2 * tile_m * tile_n * out_item  # out tile, double buffered
                 + 2 * tile_n * 4)                 # bias row
    vmem_limit = int(min(max(vmem_need + (4 << 20), 32 << 20), 64 << 20))

    cost = pl.CostEstimate(
        flops=2 * m_pad * K * N,
        transcendentals=0,
        bytes_accessed=(m_pad * K + K * N + N) * in_item + m_pad * N * out_item,
    )

    out = pl.pallas_call(
        _img_emb_kernel,
        out_shape=jax.ShapeDtypeStruct((m_pad, N), out_dtype),
        grid_spec=pltpu.PrefetchScalarGridSpec(
            num_scalar_prefetch=0,
            grid=grid,
            in_specs=[
                pl.BlockSpec((tile_m, K), lambda i, j: (i, 0)),   # x tile
                pl.BlockSpec((K, tile_n), lambda i, j: (0, j)),   # weight tile
                pl.BlockSpec((1, tile_n), lambda i, j: (0, j)),   # bias row
            ],
            out_specs=pl.BlockSpec((tile_m, tile_n), lambda i, j: (i, j)),
        ),
        compiler_params=pltpu.CompilerParams(
            dimension_semantics=("parallel", "parallel"),
            vmem_limit_bytes=vmem_limit,
        ),
        cost_estimate=cost,
    )(x, weight_t, bias2d)

    if m_pad != M:
        out = out[:M]
    return out


if __name__ == "__main__":
    key = jax.random.PRNGKey(0)

    def make_params(k, batch, input_size, hidden_size):
        kx, kw, kb = jax.random.split(k, 3)
        bound = 1.0 / (input_size ** 0.5)          # PyTorch-style init bound
        x = jax.random.normal(kx, (batch, input_size), dtype=jnp.float32)
        # PyTorch weight is (hidden, input); we keep its transpose (input, hidden).
        weight = jax.random.uniform(kw, (hidden_size, input_size),
                                    minval=-bound, maxval=bound, dtype=jnp.float32)
        bias = jax.random.uniform(kb, (hidden_size,),
                                  minval=-bound, maxval=bound, dtype=jnp.float32)
        return x, weight.T, bias

    k1, k2 = jax.random.split(key)

    # Case 1: toy shapes of the module — Linear(32, 64), batch 8 (single tile;
    # N=64 < 128 lanes so stores are masked — unavoidable at this size).
    x, wt, b = make_params(k1, 8, 32, 64)
    out = jax.block_until_ready(img_emb_forward(x, wt, b))
    ref = jnp.maximum(x @ wt + b, 0.0)
    assert out.shape == (8, 64)
    assert jnp.allclose(out, ref, atol=1e-5, rtol=1e-5)

    # Case 2: larger shapes exercising the M/N tiling and >=2 parallel grid steps.
    x2, wt2, b2 = make_params(k2, 256, 128, 256)
    out2 = jax.block_until_ready(img_emb_forward(x2, wt2, b2))
    ref2 = jnp.maximum(x2 @ wt2 + b2, 0.0)
    assert out2.shape == (256, 256)
    assert jnp.allclose(out2, ref2, atol=2e-2, rtol=2e-2)

    # Case 2b: bf16 MXU operands with f32 accumulate (halves weight DMA traffic).
    out2_bf16 = jax.block_until_ready(
        img_emb_forward(x2, wt2, b2, mxu_dtype=jnp.bfloat16))
    assert jnp.allclose(out2_bf16, ref2, atol=5e-2, rtol=5e-2)

    print("KERNEL_OK")
</pallas_src>

<mosaic_0001>
module attributes {stable_mosaic.version = 11 : i64} {
  func.func @_img_emb_kernel(%arg0: i32, %arg1: i32, %arg2: memref<8x32xf32, #tpu.memory_space<vmem>>, %arg3: memref<32x64xf32, #tpu.memory_space<vmem>>, %arg4: memref<1x64xf32, #tpu.memory_space<vmem>>, %arg5: memref<8x64xf32, #tpu.memory_space<vmem>>) attributes {dimension_semantics = [#tpu.dimension_semantics<parallel>, #tpu.dimension_semantics<parallel>], iteration_bounds = array<i64: 1, 1>, scalar_prefetch = 0 : i64, scratch_operands = 0 : i64, tpu.core_type = #tpu.core_type<tc>, window_params = [{transform_indices = @transform_0, window_bounds = array<i64: 8, 32>}, {transform_indices = @transform_1, window_bounds = array<i64: 32, 64>}, {transform_indices = @transform_2, window_bounds = array<i64: 1, 64>}, {transform_indices = @transform_3, window_bounds = array<i64: 8, 64>}]} {
    %c0 = arith.constant 0 : index
    %c0_0 = arith.constant 0 : index
    %0 = vector.load %arg2[%c0, %c0_0] : memref<8x32xf32, #tpu.memory_space<vmem>>, vector<8x32xf32>
    %c0_1 = arith.constant 0 : index
    %c0_2 = arith.constant 0 : index
    %1 = vector.load %arg3[%c0_1, %c0_2] : memref<32x64xf32, #tpu.memory_space<vmem>>, vector<32x64xf32>
    %cst = arith.constant dense<0.000000e+00> : vector<8x64xf32>
    %2 = tpu.matmul %0, %1, %cst {dimension_numbers = #tpu.dot_dimension_numbers<[1], [0], [0], [1], [0, 0, 1, 1], [], []>} : vector<8x32xf32>, vector<32x64xf32>, vector<8x64xf32> -> vector<8x64xf32>
    %c0_3 = arith.constant 0 : index
    %c0_4 = arith.constant 0 : index
    %3 = vector.load %arg4[%c0_3, %c0_4] : memref<1x64xf32, #tpu.memory_space<vmem>>, vector<1x64xf32>
    %4 = vector.broadcast %3 : vector<1x64xf32> to vector<8x64xf32>
    %5 = arith.addf %2, %4 : vector<8x64xf32>
    %cst_5 = arith.constant 0.000000e+00 : f32
    %6 = vector.broadcast %cst_5 : f32 to vector<8x64xf32>
    %7 = arith.maximumf %5, %6 : vector<8x64xf32>
    %c0_6 = arith.constant 0 : index
    %c0_7 = arith.constant 0 : index
    %8 = vector.load %arg5[%c0_6, %c0_7] : memref<8x64xf32, #tpu.memory_space<vmem>>, vector<8x64xf32>
    tpu.vector_store %arg5[%c0_6, %c0_7], %7 {strides = array<i32>} : memref<8x64xf32, #tpu.memory_space<vmem>>, vector<8x64xf32>,
    return
  }
  func.func @transform_0(%arg0: i32, %arg1: i32) -> (i32, i32) {
    %c0_i32 = arith.constant 0 : i32
    %c0_i32_0 = arith.constant 0 : i32
    return %arg0, %c0_i32 : i32, i32
  }
  func.func @transform_1(%arg0: i32, %arg1: i32) -> (i32, i32) {
    %c0_i32 = arith.constant 0 : i32
    %c0_i32_0 = arith.constant 0 : i32
    return %c0_i32, %arg1 : i32, i32
  }
  func.func @transform_2(%arg0: i32, %arg1: i32) -> (i32, i32) {
    %c0_i32 = arith.constant 0 : i32
    %c0_i32_0 = arith.constant 0 : i32
    return %c0_i32, %arg1 : i32, i32
  }
  func.func @transform_3(%arg0: i32, %arg1: i32) -> (i32, i32) {
    %c0_i32 = arith.constant 0 : i32
    return %arg0, %arg1 : i32, i32
  }
}

</mosaic_0001>

<llo_original>
// kernel: tpu_custom_call.1
$region0: #{tpu_custom_call.1}
  #allocation0 [shape = 'u32[]', space=smem, size = 0x4, offset = 0x4, fixed_abs, tag = 'smem constant byte address 0x4 - core index']
  #allocation1 [shape = 'u32[72,128]{1,0:T(1,128)}', space=vmem, size = 0x9000, scoped, tag = 'internal scratch']
  %s0 = inlined_call_operand.hbm [shape: f32[8,32], index: 0, kind: input, shape index: {}]
  %s1 = inlined_call_operand.hbm [shape: f32[32,64], index: 1, kind: input, shape index: {}]
  %s2 = inlined_call_operand.vmem [shape: f32[1,64], index: 2, kind: input, shape index: {}]
  %s3 = inlined_call_operand.hbm [shape: f32[8,64], index: 3, kind: output, shape index: {}]
  %s4 = sld [smem:[#allocation0]]
  $region30: #{tpu_custom_call.1} parent=0
    _
  %s6 = ssub.s32 1, %s4
  %s7 = scalar_select 0, %s6, %s4
  $region1: #{tpu_custom_call.1} parent=0
    #allocation2 [shape = 'u8[4096]{0}', space=vmem, size = 0x1000, scoped, tag = 'input window, operand 0, single buffered']
    #allocation3 [shape = 's32[1]{0}', space=sflag, size = 0x4, scoped, tag = 'scoped memory for tpu_custom_call.1']
    #allocation4 [shape = 's32[1]{0}', space=sflag, size = 0x4, scoped, tag = 'scoped memory for tpu_custom_call.1']
    #allocation5 [shape = 'u8[16384]{0}', space=vmem, size = 0x4000, scoped, tag = 'input window, operand 1, single buffered']
    #allocation6 [shape = 's32[1]{0}', space=sflag, size = 0x4, scoped, tag = 'scoped memory for tpu_custom_call.1']
    #allocation7 [shape = 'u8[4096]{0}', space=vmem, size = 0x1000, scoped, tag = 'output window, operand 0, single buffered']
    %8 = vsyncpa [#allocation3], 0
    %9 = vsyncpa [#allocation6], 0
    %10 = vsyncpa [#allocation4], 0
    // Predicated region
    $region2: #{tpu_custom_call.1} parent=1 // pred_check
      _
    $region3: #{tpu_custom_call.1} parent=1 // pred_check_branch
      %12 = sbr.rel (0) target = $region5
    $region4: #{tpu_custom_call.1} parent=1 // pred_region
      %14 = vsyncadd [#allocation3], 0
      %s16 = sshll.u32 %s0, 4
      %s17 = int_to_ptr.hbm [resolvable:$true] %s16
      %s18 = sshll.u32 [#allocation2], 4
      %s19 = int_to_ptr.vmem [resolvable:$true] %s18
      %21 = dma.hbm_to_vmem [thread:$0]  %s17, 128, %s19, [#allocation3]
    $region5: #{tpu_custom_call.1} parent=1 // pred_fallthru
      _
    // Predicated region
    $region6: #{tpu_custom_call.1} parent=1 // pred_check
      _
    $region7: #{tpu_custom_call.1} parent=1 // pred_check_branch
      %23 = sbr.rel (0) target = $region9
    $region8: #{tpu_custom_call.1} parent=1 // pred_region
      %25 = vsyncadd [#allocation6], 0
      %s26 = sshll.u32 %s1, 4
      %s27 = int_to_ptr.hbm [resolvable:$true] %s26
      %s28 = sshll.u32 [#allocation5], 4
      %s29 = int_to_ptr.vmem [resolvable:$true] %s28
      %34 = dma.hbm_to_vmem [thread:$0]  %s27, 512, %s29, [#allocation6], 128, 128, 8
    $region9: #{tpu_custom_call.1} parent=1 // pred_fallthru
      _
    // Predicated region
    $region10: #{tpu_custom_call.1} parent=1 // pred_check
      _
    $region11: #{tpu_custom_call.1} parent=1 // pred_check_branch
      %36 = sbr.rel (0) target = $region13
    $region12: #{tpu_custom_call.1} parent=1 // pred_region
      _
    $region13: #{tpu_custom_call.1} parent=1 // pred_fallthru
      _
    // Predicated region
    $region14: #{tpu_custom_call.1} parent=1 // pred_check
      _
    $region15: #{tpu_custom_call.1} parent=1 // pred_check_branch
      %38 = sbr.rel (0) target = $region17
    $region16: #{tpu_custom_call.1} parent=1 // pred_region
      %40 = dma.done [#allocation3], 128
    $region17: #{tpu_custom_call.1} parent=1 // pred_fallthru
      _
    // Predicated region
    $region18: #{tpu_custom_call.1} parent=1 // pred_check
      _
    $region19: #{tpu_custom_call.1} parent=1 // pred_check_branch
      %42 = sbr.rel (0) target = $region21
    $region20: #{tpu_custom_call.1} parent=1 // pred_region
      %44 = dma.done [#allocation6], 512
    $region21: #{tpu_custom_call.1} parent=1 // pred_fallthru
      _
    %v45 = vld [vmem:[#allocation2] sm:$0xff]
    %v46 = vld [vmem:[#allocation5] sm:$0xff]
    %v47 = vld [vmem:[#allocation5 + $0x8] sm:$0xff]
    %v48 = vld [vmem:[#allocation5 + $0x10] sm:$0xff]
    %v49 = vld [vmem:[#allocation5 + $0x18] sm:$0xff]
    %v50 = vld [vmem:[%s2] sm:$0x1]
    %v52 = vperm.slane %v50, 0
    %vm54 = vcmask 261120
    %v56 = vsel %vm54, %v45, 0
    %58 = vmatpush.msra.mxu0 0.0
    %59 = vmatpush.msra.mxu0 0.0
    %60 = vmatpush.msra.mxu0 0.0
    %61 = vmatpush.msra.mxu0 0.0
    %62 = vmatpush.msra.mxu0 0.0
    %63 = vmatpush.msra.mxu0 0.0
    %64 = vmatpush.msra.mxu0 0.0
    %65 = vmatpush.msra.mxu0 0.0
    %66 = vmatpush.msra.mxu0 0.0
    %67 = vmatpush.msra.mxu0 0.0
    %68 = vmatpush.msra.mxu0 0.0
    %69 = vmatpush.msra.mxu0 0.0
    %70 = vmatpush.msra.mxu0 %v49
    %71 = vmatpush.msra.mxu0 %v48
    %72 = vmatpush.msra.mxu0 %v47
    %73 = vmatpush.msra.mxu0 %v46
    %74 = vmatmul.f32.gmra.mxu0 %v56
    %v75 = vpop.f32.mrf.mxu0
    %v76 = vadd.f32 %v52, %v75
    %77 = vdwg.mxu0
    %v78 = vmax.f32 %v76, 0.0
    %vm79 = vcmask 523264
    %80 = vst.msk [vmem:[#allocation7] sm:$0xff] %vm79, %v78
    // Predicated region
    $region22: #{tpu_custom_call.1} parent=1 // pred_check
      _
    $region23: #{tpu_custom_call.1} parent=1 // pred_check_branch
      %82 = sbr.rel (0) target = $region25
    $region24: #{tpu_custom_call.1} parent=1 // pred_region
      %84 = vsyncadd [#allocation4], 0
      %s86 = sshll.u32 [#allocation7], 4
      %s87 = int_to_ptr.vmem [resolvable:$true] %s86
      %s88 = sshll.u32 %s3, 4
      %s89 = int_to_ptr.hbm [resolvable:$true] %s88
      %91 = dma.vmem_to_hbm [thread:$0]  %s87, 128, %s89, [#allocation4]
    $region25: #{tpu_custom_call.1} parent=1 // pred_fallthru
      _
    // Predicated region
    $region26: #{tpu_custom_call.1} parent=1 // pred_check
      _
    $region27: #{tpu_custom_call.1} parent=1 // pred_check_branch
      %93 = sbr.rel (0) target = $region29
    $region28: #{tpu_custom_call.1} parent=1 // pred_region
      %95 = dma.done [#allocation4], 128
    $region29: #{tpu_custom_call.1} parent=1 // pred_fallthru
      _
    %96 = vsyncpa [#allocation3], 1
    %97 = vsyncpa [#allocation6], 1
    %98 = vsyncpa [#allocation4], 1

</llo_original>
